<compile_context>
chip_gen: v7x
topology: tpu7x:2x2x1
jax: 0.10.0
libtpu: 0.0.40
codegen_flags: <defaults>
</compile_context>

<pallas_src>
import functools

import jax
import jax.numpy as jnp
from jax import lax
from jax.experimental import pallas as pl
from jax.experimental.pallas import tpu as pltpu


_LOGITS_TILE_BYTES = 2 << 20     # ~2 MiB of logits per grid step
_VMEM_WORKSET_CAP = 20 << 20     # est. working-set cap (portable to v7x 64 MiB VMEM)
_VMEM_LIMIT_BYTES = 48 << 20     # raise v5e's 16 MiB default scoped limit
_MAX_BLOCK_SAMPLES = 8           # cap static unroll of the packed-sample loop


def _largest_divisor_leq(n, cap):
    cap = max(1, min(n, cap))
    for d in range(cap, 0, -1):
        if n % d == 0:
            return d
    return 1


def _focal_loss_kernel(tgt_ref, x_ref, alpha_ref, out_ref, acc_ref, *,
                       bn, gamma, has_alpha, mask_last, valid_last):
    j = pl.program_id(1)
    nj = pl.num_programs(1)
    t_lanes = tgt_ref.shape[2]

    @pl.when(j == 0)
    def _():
        acc_ref[...] = jnp.zeros_like(acc_ref)

    if has_alpha:
        alpha = alpha_ref[...].astype(jnp.float32)               # (C, 1)
    if mask_last:
        lane = lax.broadcasted_iota(jnp.int32, (1, t_lanes), 1)  # (1, T)

    # Static (small, bn <= 8) unroll over samples packed into this block; each
    # row is the 2-D classes-on-sublanes / HW-on-lanes pattern.
    for b in range(bn):
        x = x_ref[b].astype(jnp.float32)          # (C, T)
        tgt = tgt_ref[b].astype(jnp.int32)        # (1, T)

        # Numerically stable log_softmax pieces over the class (sublane) axis.
        m = jnp.max(x, axis=0, keepdims=True)                         # (1, T)
        z = x - m                                                     # (C, T)
        lse = jnp.log(jnp.sum(jnp.exp(z), axis=0, keepdims=True))     # (1, T)

        # Gather the target-class shifted logit via a boolean select (no f32
        # one-hot, no full (C,T) logp materialization).
        cls = lax.broadcasted_iota(jnp.int32, z.shape, 0)             # (C, T)
        sel = cls == tgt                                              # (C, T)
        zt = jnp.sum(jnp.where(sel, z, 0.0), axis=0, keepdims=True)   # (1, T)
        logpt = zt - lse                                              # (1, T)
        pt = jnp.exp(logpt)

        if has_alpha:
            at = jnp.sum(jnp.where(sel, alpha, 0.0), axis=0, keepdims=True)
            logpt = logpt * at

        # Focal modulation, specialized on the (static) gamma.
        if gamma == 0:
            loss = -logpt
        else:
            omp = 1.0 - pt
            if float(gamma) == int(gamma) and gamma > 0:
                mod = lax.integer_pow(omp, int(gamma))   # VPU mults, no EUP pow
            else:
                mod = jnp.power(omp, jnp.float32(gamma))
            loss = -mod * logpt                                       # (1, T)

        # Accumulate into the lane-dense per-sample accumulator.  The padded /
        # out-of-bounds lanes only exist on the final lane tile; mask them
        # there with a select (NaN/inf-safe) BEFORE accumulating.
        if not mask_last:
            acc_ref[b] += loss
        else:
            @pl.when(j < nj - 1)
            def _():
                acc_ref[b] += loss

            @pl.when(j == nj - 1)
            def _():
                acc_ref[b] += jnp.where(lane < valid_last, loss, 0.0)

    # Single cross-lane reduction per sample at the end of the tile loop.
    @pl.when(j == nj - 1)
    def _():
        for b in range(bn):
            out_ref[b] = jnp.sum(acc_ref[b], axis=1, keepdims=True)   # (1, 1)


def focal_loss(x, target, *, gamma=0, alpha=None, size_average=True,
               block_lanes=None):
    """Pallas FocalLoss forward.

    x: (N, C, *spatial) or (M, C) logits (any float dtype, DMA'd as-is).
    target: integer class indices with matching leading/spatial shape.
    """
    if x.ndim > 2:
        n, c = x.shape[0], x.shape[1]
        x3 = x.reshape(n, c, -1)                 # native NCHW: no transpose copy
    else:
        m0, c = x.shape
        n = 1
        # TODO(synk): lane-major variant to avoid this transpose on the 2-D path.
        x3 = x.T.reshape(1, c, m0)
    hw = x3.shape[2]
    m_total = n * hw

    # Keep the targets at their native integer width (no wrapper cast copy);
    # the kernel casts the (1, T) row to int32 on-chip.
    if jnp.issubdtype(target.dtype, jnp.integer):
        tgt3 = target.reshape(n, 1, hw)
    else:
        tgt3 = target.reshape(n, 1, hw).astype(jnp.int32)

    # alpha handling (same semantics as the torch __init__).
    has_alpha = alpha is not None
    if isinstance(alpha, (float, int)) and not isinstance(alpha, bool):
        alpha_vec = jnp.asarray([alpha, 1.0 - alpha], dtype=jnp.float32)
    elif isinstance(alpha, (list, tuple)):
        alpha_vec = jnp.asarray(alpha, dtype=jnp.float32)
    elif alpha is None:
        alpha_vec = jnp.ones((c,), dtype=jnp.float32)
    else:
        alpha_vec = jnp.asarray(alpha, dtype=jnp.float32).reshape(-1)
    if has_alpha:
        assert alpha_vec.shape[0] == c, "alpha length must equal number of classes"
    alpha_col = alpha_vec.reshape(c, 1)

    # ---- tile selection -----------------------------------------------------
    x_item = jnp.dtype(x3.dtype).itemsize
    t_item = jnp.dtype(tgt3.dtype).itemsize
    hw128 = ((hw + 127) // 128) * 128

    # Per-lane VMEM footprint estimate: double-buffered inputs, f32 accumulator,
    # ~3 live (C, T) f32 temporaries and a handful of (1, T) rows.
    per_lane = 2 * c * x_item + 2 * t_item + 4 + 3 * c * 4 + 24

    if block_lanes is None:
        lanes = _LOGITS_TILE_BYTES // max(1, c * x_item)
        lanes = min(lanes, _VMEM_WORKSET_CAP // per_lane)
        block_lanes = min(max(lanes, 512), 1 << 17)
    block_lanes = max(128, (block_lanes // 128) * 128)

    t_hw = min(block_lanes, hw128)

    # Small-spatial case: pack several whole samples per grid step (bn | n).
    bn = 1
    if t_hw >= hw128 and n > 1:
        room = max(1, min(block_lanes // hw128,
                          _VMEM_WORKSET_CAP // max(1, per_lane * hw128)))
        bn = _largest_divisor_leq(n, min(room, _MAX_BLOCK_SAMPLES))
        t_hw = hw128

    nj = pl.cdiv(hw, t_hw)                 # NO jnp.pad: ragged last tile is masked
    valid_last = hw - (nj - 1) * t_hw
    mask_last = valid_last < t_hw

    kernel = functools.partial(_focal_loss_kernel, bn=bn, gamma=gamma,
                               has_alpha=has_alpha, mask_last=mask_last,
                               valid_last=valid_last)

    partials = pl.pallas_call(
        kernel,
        out_shape=jax.ShapeDtypeStruct((n, 1, 1), jnp.float32),
        grid_spec=pltpu.PrefetchScalarGridSpec(
            num_scalar_prefetch=0,
            grid=(n // bn, nj),
            in_specs=[
                pl.BlockSpec((bn, 1, t_hw), lambda i, j: (i, 0, j)),   # targets
                pl.BlockSpec((bn, c, t_hw), lambda i, j: (i, 0, j)),   # logits
                pl.BlockSpec((c, 1), lambda i, j: (0, 0)),             # alpha
            ],
            out_specs=pl.BlockSpec((bn, 1, 1), lambda i, j: (i, 0, 0)),
            scratch_shapes=[pltpu.VMEM((bn, 1, t_hw), jnp.float32)],
        ),
        compiler_params=pltpu.CompilerParams(
            dimension_semantics=("parallel", "arbitrary"),
            vmem_limit_bytes=_VMEM_LIMIT_BYTES),
    )(tgt3, x3, alpha_col)

    total = jnp.sum(partials)
    if size_average:
        return total / jnp.float32(m_total)
    return total


def _reference_focal_loss(x, target, gamma, alpha, size_average):
    n, c = x.shape[0], x.shape[1]
    x2 = x.reshape(n, c, -1).transpose(0, 2, 1).reshape(-1, c)
    t = target.reshape(-1)
    logp = jax.nn.log_softmax(x2.astype(jnp.float32), axis=1)
    logpt = jnp.take_along_axis(logp, t[:, None], axis=1)[:, 0]
    pt = jnp.exp(logpt)
    if alpha is not None:
        at = jnp.asarray(alpha, jnp.float32)[t]
        logpt = logpt * at
    loss = -1.0 * (1.0 - pt) ** gamma * logpt
    return loss.mean() if size_average else loss.sum()


if __name__ == "__main__":
    key = jax.random.PRNGKey(0)
    k1, k2, k3, k4 = jax.random.split(key, 4)

    # Case 1: gamma=2, per-class alpha, even spatial size. Default tiling packs
    # both samples into a single grid step (bn=2, single lane tile, no mask).
    N, C, H, W = 2, 4, 16, 16
    x = jax.random.normal(k1, (N, C, H, W), dtype=jnp.float32)
    target = jax.random.randint(k2, (N, H, W), 0, C, dtype=jnp.int32)
    alpha = [0.1, 0.2, 0.3, 0.4]
    out = jax.block_until_ready(focal_loss(x, target, gamma=2, alpha=alpha,
                                           size_average=True))
    ref = _reference_focal_loss(x, target, 2, alpha, True)
    assert jnp.allclose(out, ref, rtol=1e-5, atol=1e-6), (out, ref)

    # Case 2: gamma=0, alpha=None, ragged spatial size + small tile: exercises
    # multi-tile accumulation and the last-tile lane mask (no wrapper padding).
    H2, W2 = 9, 23
    x2 = jax.random.normal(k3, (N, C, H2, W2), dtype=jnp.float32)
    t2 = jax.random.randint(k4, (N, H2, W2), 0, C, dtype=jnp.int32)
    out2 = jax.block_until_ready(focal_loss(x2, t2, gamma=0, alpha=None,
                                            size_average=False,
                                            block_lanes=128))
    ref2 = _reference_focal_loss(x2, t2, 0, None, False)
    assert jnp.allclose(out2, ref2, rtol=1e-5, atol=1e-4), (out2, ref2)

    # Case 3: ragged spatial with DEFAULT tiling: batch packing (bn=2) combined
    # with the out-of-bounds-lane mask on the single ragged tile.
    out3 = jax.block_until_ready(focal_loss(x2, t2, gamma=2, alpha=alpha,
                                            size_average=True))
    ref3 = _reference_focal_loss(x2, t2, 2, alpha, True)
    assert jnp.allclose(out3, ref3, rtol=1e-5, atol=1e-6), (out3, ref3)

    print("KERNEL_OK")
</pallas_src>

<mosaic_0001>
module attributes {stable_mosaic.version = 11 : i64} {
  func.func @_focal_loss_kernel(%arg0: i32, %arg1: i32, %arg2: memref<2x1x256xi32, #tpu.memory_space<vmem>>, %arg3: memref<2x4x256xf32, #tpu.memory_space<vmem>>, %arg4: memref<4x1xf32, #tpu.memory_space<vmem>>, %arg5: memref<2x1x1xf32, #tpu.memory_space<vmem>>, %arg6: memref<2x1x256xf32, #tpu.memory_space<vmem>>) attributes {dimension_semantics = [#tpu.dimension_semantics<parallel>, #tpu.dimension_semantics<arbitrary>], iteration_bounds = array<i64: 1, 1>, scalar_prefetch = 0 : i64, scratch_operands = 1 : i64, tpu.core_type = #tpu.core_type<tc>, window_params = [{transform_indices = @transform_0, window_bounds = array<i64: 2, 1, 256>}, {transform_indices = @transform_1, window_bounds = array<i64: 2, 4, 256>}, {pipeline_mode = #tpu.pipeline_mode<synchronous>, transform_indices = @transform_2, window_bounds = array<i64: 4, 1>}, {transform_indices = @transform_3, window_bounds = array<i64: 2, 1, 1>}]} {
    %c0_i32 = arith.constant 0 : i32
    %0 = arith.cmpi eq, %arg1, %c0_i32 : i32
    %1 = arith.extui %0 : i1 to i32
    %c0_i32_0 = arith.constant 0 : i32
    %2 = arith.cmpi ne, %1, %c0_i32_0 : i32
    scf.if %2 {
      %cst_42 = arith.constant 0.000000e+00 : f32
      %87 = vector.broadcast %cst_42 : f32 to vector<2x1x256xf32>
      %c0_43 = arith.constant 0 : index
      %c0_44 = arith.constant 0 : index
      %c0_45 = arith.constant 0 : index
      %88 = vector.load %arg6[%c0_43, %c0_44, %c0_45] : memref<2x1x256xf32, #tpu.memory_space<vmem>>, vector<2x1x256xf32>
      tpu.vector_store %arg6[%c0_43, %c0_44, %c0_45], %87 {strides = array<i32>} : memref<2x1x256xf32, #tpu.memory_space<vmem>>, vector<2x1x256xf32>,
    } else {
    }
    %c0 = arith.constant 0 : index
    %c0_1 = arith.constant 0 : index
    %3 = vector.load %arg4[%c0, %c0_1] : memref<4x1xf32, #tpu.memory_space<vmem>>, vector<4x1xf32>
    %c0_2 = arith.constant 0 : index
    %c0_3 = arith.constant 0 : index
    %c0_4 = arith.constant 0 : index
    %4 = vector.load %arg3[%c0_2, %c0_3, %c0_4] : memref<2x4x256xf32, #tpu.memory_space<vmem>>, vector<1x4x256xf32>
    %5 = vector.shape_cast %4 : vector<1x4x256xf32> to vector<4x256xf32>
    %c0_5 = arith.constant 0 : index
    %c0_6 = arith.constant 0 : index
    %c0_7 = arith.constant 0 : index
    %6 = vector.load %arg2[%c0_5, %c0_6, %c0_7] : memref<2x1x256xi32, #tpu.memory_space<vmem>>, vector<1x1x256xi32>
    %7 = vector.shape_cast %6 : vector<1x1x256xi32> to vector<1x256xi32>
    %cst = arith.constant dense<0xFF800000> : vector<256xf32>
    %8 = vector.multi_reduction <maximumf>, %5, %cst [0] : vector<4x256xf32> to vector<256xf32>
    %9 = vector.shape_cast %8 : vector<256xf32> to vector<1x256xf32>
    %10 = vector.broadcast %9 : vector<1x256xf32> to vector<4x256xf32>
    %11 = arith.subf %5, %10 : vector<4x256xf32>
    %12 = math.exp %11 : vector<4x256xf32>
    %cst_8 = arith.constant dense<0.000000e+00> : vector<256xf32>
    %13 = vector.multi_reduction <add>, %12, %cst_8 [0] : vector<4x256xf32> to vector<256xf32>
    %14 = vector.shape_cast %13 : vector<256xf32> to vector<1x256xf32>
    %15 = math.log %14 : vector<1x256xf32>
    %16 = tpu.iota {dimensions = array<i32: 0>} : vector<4x256xi32>
    %17 = vector.broadcast %7 : vector<1x256xi32> to vector<4x256xi32>
    %18 = arith.cmpi eq, %16, %17 : vector<4x256xi32>
    %cst_9 = arith.constant 0.000000e+00 : f32
    %19 = vector.broadcast %cst_9 : f32 to vector<4x256xf32>
    %20 = arith.select %18, %11, %19 : vector<4x256xi1>, vector<4x256xf32>
    %cst_10 = arith.constant dense<0.000000e+00> : vector<256xf32>
    %21 = vector.multi_reduction <add>, %20, %cst_10 [0] : vector<4x256xf32> to vector<256xf32>
    %22 = vector.shape_cast %21 : vector<256xf32> to vector<1x256xf32>
    %23 = arith.subf %22, %15 : vector<1x256xf32>
    %24 = math.exp %23 : vector<1x256xf32>
    %cst_11 = arith.constant 0.000000e+00 : f32
    %25 = vector.shape_cast %3 : vector<4x1xf32> to vector<4x1xf32>
    %26 = vector.broadcast %25 : vector<4x1xf32> to vector<4x256xf32>
    %27 = vector.broadcast %cst_11 : f32 to vector<4x256xf32>
    %28 = arith.select %18, %26, %27 : vector<4x256xi1>, vector<4x256xf32>
    %cst_12 = arith.constant dense<0.000000e+00> : vector<256xf32>
    %29 = vector.multi_reduction <add>, %28, %cst_12 [0] : vector<4x256xf32> to vector<256xf32>
    %30 = vector.shape_cast %29 : vector<256xf32> to vector<1x256xf32>
    %31 = arith.mulf %23, %30 : vector<1x256xf32>
    %cst_13 = arith.constant 1.000000e+00 : f32
    %32 = vector.broadcast %cst_13 : f32 to vector<1x256xf32>
    %33 = arith.subf %32, %24 : vector<1x256xf32>
    %34 = arith.mulf %33, %33 : vector<1x256xf32>
    %cst_14 = arith.constant 0.000000e+00 : f32
    %35 = vector.broadcast %cst_14 : f32 to vector<1x256xf32>
    %36 = arith.subf %35, %34 : vector<1x256xf32>
    %37 = arith.mulf %36, %31 : vector<1x256xf32>
    %c0_15 = arith.constant 0 : index
    %c0_16 = arith.constant 0 : index
    %c0_17 = arith.constant 0 : index
    %38 = vector.load %arg6[%c0_15, %c0_16, %c0_17] : memref<2x1x256xf32, #tpu.memory_space<vmem>>, vector<1x1x256xf32>
    %39 = vector.shape_cast %38 : vector<1x1x256xf32> to vector<1x256xf32>
    %40 = arith.addf %39, %37 : vector<1x256xf32>
    %c0_18 = arith.constant 0 : index
    %c0_19 = arith.constant 0 : index
    %c0_20 = arith.constant 0 : index
    %41 = vector.load %arg6[%c0_18, %c0_19, %c0_20] : memref<2x1x256xf32, #tpu.memory_space<vmem>>, vector<1x1x256xf32>
    %42 = vector.shape_cast %41 : vector<1x1x256xf32> to vector<1x256xf32>
    %43 = vector.shape_cast %40 : vector<1x256xf32> to vector<1x1x256xf32>
    tpu.vector_store %arg6[%c0_18, %c0_19, %c0_20], %43 {strides = array<i32>} : memref<2x1x256xf32, #tpu.memory_space<vmem>>, vector<1x1x256xf32>,
    %c1 = arith.constant 1 : index
    %c0_21 = arith.constant 0 : index
    %c0_22 = arith.constant 0 : index
    %44 = vector.load %arg3[%c1, %c0_21, %c0_22] : memref<2x4x256xf32, #tpu.memory_space<vmem>>, vector<1x4x256xf32>
    %45 = vector.shape_cast %44 : vector<1x4x256xf32> to vector<4x256xf32>
    %c1_23 = arith.constant 1 : index
    %c0_24 = arith.constant 0 : index
    %c0_25 = arith.constant 0 : index
    %46 = vector.load %arg2[%c1_23, %c0_24, %c0_25] : memref<2x1x256xi32, #tpu.memory_space<vmem>>, vector<1x1x256xi32>
    %47 = vector.shape_cast %46 : vector<1x1x256xi32> to vector<1x256xi32>
    %cst_26 = arith.constant dense<0xFF800000> : vector<256xf32>
    %48 = vector.multi_reduction <maximumf>, %45, %cst_26 [0] : vector<4x256xf32> to vector<256xf32>
    %49 = vector.shape_cast %48 : vector<256xf32> to vector<1x256xf32>
    %50 = vector.broadcast %49 : vector<1x256xf32> to vector<4x256xf32>
    %51 = arith.subf %45, %50 : vector<4x256xf32>
    %52 = math.exp %51 : vector<4x256xf32>
    %cst_27 = arith.constant dense<0.000000e+00> : vector<256xf32>
    %53 = vector.multi_reduction <add>, %52, %cst_27 [0] : vector<4x256xf32> to vector<256xf32>
    %54 = vector.shape_cast %53 : vector<256xf32> to vector<1x256xf32>
    %55 = math.log %54 : vector<1x256xf32>
    %56 = tpu.iota {dimensions = array<i32: 0>} : vector<4x256xi32>
    %57 = vector.broadcast %47 : vector<1x256xi32> to vector<4x256xi32>
    %58 = arith.cmpi eq, %56, %57 : vector<4x256xi32>
    %cst_28 = arith.constant 0.000000e+00 : f32
    %59 = vector.broadcast %cst_28 : f32 to vector<4x256xf32>
    %60 = arith.select %58, %51, %59 : vector<4x256xi1>, vector<4x256xf32>
    %cst_29 = arith.constant dense<0.000000e+00> : vector<256xf32>
    %61 = vector.multi_reduction <add>, %60, %cst_29 [0] : vector<4x256xf32> to vector<256xf32>
    %62 = vector.shape_cast %61 : vector<256xf32> to vector<1x256xf32>
    %63 = arith.subf %62, %55 : vector<1x256xf32>
    %64 = math.exp %63 : vector<1x256xf32>
    %cst_30 = arith.constant 0.000000e+00 : f32
    %65 = vector.shape_cast %3 : vector<4x1xf32> to vector<4x1xf32>
    %66 = vector.broadcast %65 : vector<4x1xf32> to vector<4x256xf32>
    %67 = vector.broadcast %cst_30 : f32 to vector<4x256xf32>
    %68 = arith.select %58, %66, %67 : vector<4x256xi1>, vector<4x256xf32>
    %cst_31 = arith.constant dense<0.000000e+00> : vector<256xf32>
    %69 = vector.multi_reduction <add>, %68, %cst_31 [0] : vector<4x256xf32> to vector<256xf32>
    %70 = vector.shape_cast %69 : vector<256xf32> to vector<1x256xf32>
    %71 = arith.mulf %63, %70 : vector<1x256xf32>
    %cst_32 = arith.constant 1.000000e+00 : f32
    %72 = vector.broadcast %cst_32 : f32 to vector<1x256xf32>
    %73 = arith.subf %72, %64 : vector<1x256xf32>
    %74 = arith.mulf %73, %73 : vector<1x256xf32>
    %cst_33 = arith.constant 0.000000e+00 : f32
    %75 = vector.broadcast %cst_33 : f32 to vector<1x256xf32>
    %76 = arith.subf %75, %74 : vector<1x256xf32>
    %77 = arith.mulf %76, %71 : vector<1x256xf32>
    %c1_34 = arith.constant 1 : index
    %c0_35 = arith.constant 0 : index
    %c0_36 = arith.constant 0 : index
    %78 = vector.load %arg6[%c1_34, %c0_35, %c0_36] : memref<2x1x256xf32, #tpu.memory_space<vmem>>, vector<1x1x256xf32>
    %79 = vector.shape_cast %78 : vector<1x1x256xf32> to vector<1x256xf32>
    %80 = arith.addf %79, %77 : vector<1x256xf32>
    %c1_37 = arith.constant 1 : index
    %c0_38 = arith.constant 0 : index
    %c0_39 = arith.constant 0 : index
    %81 = vector.load %arg6[%c1_37, %c0_38, %c0_39] : memref<2x1x256xf32, #tpu.memory_space<vmem>>, vector<1x1x256xf32>
    %82 = vector.shape_cast %81 : vector<1x1x256xf32> to vector<1x256xf32>
    %83 = vector.shape_cast %80 : vector<1x256xf32> to vector<1x1x256xf32>
    tpu.vector_store %arg6[%c1_37, %c0_38, %c0_39], %83 {strides = array<i32>} : memref<2x1x256xf32, #tpu.memory_space<vmem>>, vector<1x1x256xf32>,
    %c0_i32_40 = arith.constant 0 : i32
    %84 = arith.cmpi eq, %arg1, %c0_i32_40 : i32
    %85 = arith.extui %84 : i1 to i32
    %c0_i32_41 = arith.constant 0 : i32
    %86 = arith.cmpi ne, %85, %c0_i32_41 : i32
    scf.if %86 {
      %c0_42 = arith.constant 0 : index
      %c0_43 = arith.constant 0 : index
      %c0_44 = arith.constant 0 : index
      %87 = vector.load %arg6[%c0_42, %c0_43, %c0_44] : memref<2x1x256xf32, #tpu.memory_space<vmem>>, vector<1x1x256xf32>
      %88 = vector.shape_cast %87 : vector<1x1x256xf32> to vector<1x256xf32>
      %cst_45 = arith.constant dense<0.000000e+00> : vector<1xf32>
      %89 = vector.multi_reduction <add>, %88, %cst_45 [1] : vector<1x256xf32> to vector<1xf32>
      %90 = vector.shape_cast %89 : vector<1xf32> to vector<1x1xf32>
      %c0_46 = arith.constant 0 : index
      %c0_47 = arith.constant 0 : index
      %c0_48 = arith.constant 0 : index
      %91 = vector.load %arg5[%c0_46, %c0_47, %c0_48] : memref<2x1x1xf32, #tpu.memory_space<vmem>>, vector<1x1x1xf32>
      %92 = vector.shape_cast %91 : vector<1x1x1xf32> to vector<1x1xf32>
      %93 = vector.shape_cast %90 : vector<1x1xf32> to vector<1x1x1xf32>
      tpu.vector_store %arg5[%c0_46, %c0_47, %c0_48], %93 {strides = array<i32>} : memref<2x1x1xf32, #tpu.memory_space<vmem>>, vector<1x1x1xf32>,
      %c1_49 = arith.constant 1 : index
      %c0_50 = arith.constant 0 : index
      %c0_51 = arith.constant 0 : index
      %94 = vector.load %arg6[%c1_49, %c0_50, %c0_51] : memref<2x1x256xf32, #tpu.memory_space<vmem>>, vector<1x1x256xf32>
      %95 = vector.shape_cast %94 : vector<1x1x256xf32> to vector<1x256xf32>
      %cst_52 = arith.constant dense<0.000000e+00> : vector<1xf32>
      %96 = vector.multi_reduction <add>, %95, %cst_52 [1] : vector<1x256xf32> to vector<1xf32>
      %97 = vector.shape_cast %96 : vector<1xf32> to vector<1x1xf32>
      %c1_53 = arith.constant 1 : index
      %c0_54 = arith.constant 0 : index
      %c0_55 = arith.constant 0 : index
      %98 = vector.load %arg5[%c1_53, %c0_54, %c0_55] : memref<2x1x1xf32, #tpu.memory_space<vmem>>, vector<1x1x1xf32>
      %99 = vector.shape_cast %98 : vector<1x1x1xf32> to vector<1x1xf32>
      %100 = vector.shape_cast %97 : vector<1x1xf32> to vector<1x1x1xf32>
      tpu.vector_store %arg5[%c1_53, %c0_54, %c0_55], %100 {strides = array<i32>} : memref<2x1x1xf32, #tpu.memory_space<vmem>>, vector<1x1x1xf32>,
    } else {
    }
    return
  }
  func.func @transform_0(%arg0: i32, %arg1: i32) -> (i32, i32, i32) {
    %c0_i32 = arith.constant 0 : i32
    %c0_i32_0 = arith.constant 0 : i32
    return %arg0, %c0_i32, %arg1 : i32, i32, i32
  }
  func.func @transform_1(%arg0: i32, %arg1: i32) -> (i32, i32, i32) {
    %c0_i32 = arith.constant 0 : i32
    %c0_i32_0 = arith.constant 0 : i32
    return %arg0, %c0_i32, %arg1 : i32, i32, i32
  }
  func.func @transform_2(%arg0: i32, %arg1: i32) -> (i32, i32) {
    %c0_i32 = arith.constant 0 : i32
    %c0_i32_0 = arith.constant 0 : i32
    %c0_i32_1 = arith.constant 0 : i32
    return %c0_i32, %c0_i32_0 : i32, i32
  }
  func.func @transform_3(%arg0: i32, %arg1: i32) -> (i32, i32, i32) {
    %c0_i32 = arith.constant 0 : i32
    %c0_i32_0 = arith.constant 0 : i32
    %c0_i32_1 = arith.constant 0 : i32
    return %arg0, %c0_i32, %c0_i32_0 : i32, i32, i32
  }
}

</mosaic_0001>

<llo_original>
// kernel: tpu_custom_call.1
$region0: #{tpu_custom_call.1}
  #allocation0 [shape = 'u32[]', space=smem, size = 0x4, offset = 0x4, fixed_abs, tag = 'smem constant byte address 0x4 - core index']
  #allocation1 [shape = 'u32[144,128]{1,0:T(1,128)}', space=vmem, size = 0x12000, scoped, tag = 'internal scratch']
  #allocation2 [shape = 'f32[2,1,256]{2,1,0:T(1,128)}', space=vmem, size = 0x800, scoped, tag = 'scratch operand']
  %s0 = inlined_call_operand.vmem [shape: s32[2,1,256], index: 0, kind: input, shape index: {}]
  %s1 = inlined_call_operand.hbm [shape: f32[2,4,256], index: 1, kind: input, shape index: {}]
  %s2 = inlined_call_operand.vmem [shape: f32[4,1], index: 2, kind: input, shape index: {}]
  %s3 = inlined_call_operand.vmem [shape: f32[2,1,1], index: 3, kind: output, shape index: {}]
  %s4 = sld [smem:[#allocation0]]
  $region34: #{tpu_custom_call.1} parent=0
    _
  %s6 = ssub.s32 1, %s4
  %s7 = scalar_select 0, %s6, %s4
  $region1: #{tpu_custom_call.1} parent=0
    #allocation3 [shape = 'u8[8192]{0}', space=vmem, size = 0x2000, scoped, tag = 'input window, operand 1, single buffered']
    #allocation4 [shape = 's32[1]{0}', space=sflag, size = 0x4, scoped, tag = 'scoped memory for tpu_custom_call.1']
    %8 = vsyncpa [#allocation4], 0
    // Predicated region
    $region2: #{tpu_custom_call.1} parent=1 // pred_check
      _
    $region3: #{tpu_custom_call.1} parent=1 // pred_check_branch
      %10 = sbr.rel (0) target = $region5
    $region4: #{tpu_custom_call.1} parent=1 // pred_region
      _
    $region5: #{tpu_custom_call.1} parent=1 // pred_fallthru
      _
    // Predicated region
    $region6: #{tpu_custom_call.1} parent=1 // pred_check
      _
    $region7: #{tpu_custom_call.1} parent=1 // pred_check_branch
      %12 = sbr.rel (0) target = $region9
    $region8: #{tpu_custom_call.1} parent=1 // pred_region
      %s14 = ssub.s32 256, 256
      %15 = vsyncadd [#allocation4], %s14
      %s16 = sshll.u32 [#allocation3], 4
      %s17 = int_to_ptr.vmem [resolvable:$true] %s16
      %22 = dma.hbm_to_vmem [thread:$0]  %s1, 256, %s17, [#allocation4], 128, 128, 8
    $region9: #{tpu_custom_call.1} parent=1 // pred_fallthru
      _
    // Predicated region
    $region10: #{tpu_custom_call.1} parent=1 // pred_check
      _
    $region11: #{tpu_custom_call.1} parent=1 // pred_check_branch
      %24 = sbr.rel (0) target = $region13
    $region12: #{tpu_custom_call.1} parent=1 // pred_region
      _
    $region13: #{tpu_custom_call.1} parent=1 // pred_fallthru
      _
    // Predicated region
    $region14: #{tpu_custom_call.1} parent=1 // pred_check
      _
    $region15: #{tpu_custom_call.1} parent=1 // pred_check_branch
      %26 = sbr.rel (0) target = $region17
    $region16: #{tpu_custom_call.1} parent=1 // pred_region
      %27 = dma.done [#allocation4], 256
    $region17: #{tpu_custom_call.1} parent=1 // pred_fallthru
      _
    %p28 = scmp.eq.s32.totalorder 0, 0
    // Predicated region
    $region18: #{tpu_custom_call.1} parent=1 // pred_check
      %p29 = pneg %p28
    $region19: #{tpu_custom_call.1} parent=1 // pred_check_branch
      %31 = sbr.rel (%p29) target = $region21
    $region20: #{tpu_custom_call.1} parent=1 // pred_region
      %v32 = vlaneseq
      %vm33 = vcmp.ge.s32.totalorder %v32, 0
      %vm34 = vcmp.lt.s32.totalorder %v32, 256
      %vm35 = vmand %vm33, %vm34
      %36 = vst.msk [vmem:[#allocation2] sm:$0x3] %vm35, 0.0
      %37 = vst.msk [vmem:[#allocation2 + $0x2] sm:$0x3] %vm35, 0.0
    $region21: #{tpu_custom_call.1} parent=1 // pred_fallthru
      _
    %v38 = vld [vmem:[%s2] sm:$0xf]
    %v39 = vld [vmem:[#allocation3] sm:$0xff]
    %v40 = vld [vmem:[%s0] sm:$0x3]
    %v42 = vcombine.high %v39, %v39
    %vm44 = vcmask 1043456
    %v45 = vsel %vm44, %v39, -inf
    %v46 = vrot.slane %v45, 4
    %v47 = vmax.f32 %v45, %v46
    %v48 = vrot.slane %v47, 2
    %v49 = vmax.f32 %v47, %v48
    %v50 = vrot.slane %v49, 1
    %v51 = vmax.f32 %v49, %v50
    %v52 = vsel %vm44, %v42, -inf
    %v53 = vrot.slane %v52, 4
    %v54 = vmax.f32 %v52, %v53
    %v55 = vrot.slane %v54, 2
    %v56 = vmax.f32 %v54, %v55
    %v57 = vrot.slane %v56, 1
    %v58 = vmax.f32 %v56, %v57
    %v61 = vcombine.low %v51, %v58
    %v63 = vsub.f32 %v39, %v61
    %v64 = vmul.f32 %v63, 1.442695
    %v65 = vpow.pop %v64
    %v67 = vcombine.high %v65, %v65
    %v69 = vsel %vm44, %v65, 0.0
    %v70 = vrot.slane %v69, 4
    %v71 = vadd.f32 %v69, %v70
    %v72 = vrot.slane %v71, 2
    %v73 = vadd.f32 %v71, %v72
    %v74 = vrot.slane %v73, 1
    %v75 = vadd.f32 %v73, %v74
    %v76 = vsel %vm44, %v67, 0.0
    %v77 = vrot.slane %v76, 4
    %v78 = vadd.f32 %v76, %v77
    %v79 = vrot.slane %v78, 2
    %v80 = vadd.f32 %v78, %v79
    %v81 = vrot.slane %v80, 1
    %v82 = vadd.f32 %v80, %v81
    %v83 = vlog2.pop %v75
    %v84 = vmul.f32 %v83, 0.6931472
    %v85 = vlog2.pop %v82
    %v86 = vmul.f32 %v85, 0.6931472
    %v87 = vlaneseq
    %v88 = vshrl.u32 %v87, 7
    %v89 = vlaneseq
    %v90 = vshrl.u32 %v89, 7
    %v91 = vsub.s32 0, %v90
    %v92 = vrot.slane %v40, %v91
    %v93 = vlaneseq
    %v94 = vshrl.u32 %v93, 7
    %v95 = vsub.s32 1, %v94
    %v96 = vrot.slane %v40, %v95
    %vm97 = vcmp.eq.s32.totalorder %v88, %v92
    %vm98 = vcmp.eq.s32.totalorder %v88, %v96
    %v100 = vcombine.high %v63, %v63
    %v102 = vsel %vm97, %v63, 0.0
    %v103 = vsel %vm98, %v100, 0.0
    %v104 = vsel %vm44, %v102, 0.0
    %v105 = vrot.slane %v104, 4
    %v106 = vadd.f32 %v104, %v105
    %v107 = vrot.slane %v106, 2
    %v108 = vadd.f32 %v106, %v107
    %v109 = vrot.slane %v108, 1
    %v110 = vadd.f32 %v108, %v109
    %v111 = vsel %vm44, %v103, 0.0
    %v112 = vrot.slane %v111, 4
    %v113 = vadd.f32 %v111, %v112
    %v114 = vrot.slane %v113, 2
    %v115 = vadd.f32 %v113, %v114
    %v116 = vrot.slane %v115, 1
    %v117 = vadd.f32 %v115, %v116
    %v118 = vsub.f32 %v110, %v84
    %v119 = vsub.f32 %v117, %v86
    %v120 = vmul.f32 %v118, 1.442695
    %v121 = vpow.pop %v120
    %v122 = vmul.f32 %v119, 1.442695
    %v123 = vpow.pop %v122
    %125 = vset.pattern.permute.xlu0 0
    %126 = vperm.xlu0 %125, %v38
    %v127 = vpop.permute.xlu0 %126
    %v129 = vsel %vm97, %v127, 0.0
    %v130 = vsel %vm98, %v127, 0.0
    %v131 = vsel %vm44, %v129, 0.0
    %v132 = vrot.slane %v131, 4
    %v133 = vadd.f32 %v131, %v132
    %v134 = vrot.slane %v133, 2
    %v135 = vadd.f32 %v133, %v134
    %v136 = vrot.slane %v135, 1
    %v137 = vadd.f32 %v135, %v136
    %v138 = vsel %vm44, %v130, 0.0
    %v139 = vrot.slane %v138, 4
    %v140 = vadd.f32 %v138, %v139
    %v141 = vrot.slane %v140, 2
    %v142 = vadd.f32 %v140, %v141
    %v143 = vrot.slane %v142, 1
    %v144 = vadd.f32 %v142, %v143
    %v145 = vmul.f32 %v118, %v137
    %v146 = vmul.f32 %v119, %v144
    %v147 = vsub.f32 1.0, %v121
    %v148 = vsub.f32 1.0, %v123
    %v149 = vmul.f32 %v147, %v147
    %v150 = vmul.f32 %v148, %v148
    %v151 = vsub.f32 0.0, %v149
    %v152 = vsub.f32 0.0, %v150
    %v153 = vmul.f32 %v151, %v145
    %v154 = vmul.f32 %v152, %v146
    %v155 = vld [vmem:[#allocation2] sm:$0x3]
    %v158 = vcombine.low %v153, %v154
    %v160 = vunpack.c.l.s4 1966171168
    %v161 = vunpack.c.0.s8 %v160
    %v162 = vlaneseq
    %v163 = vshrl.u32 %v162, 7
    %v164 = vsub.s32 %v161, %v163
    %v165 = vrot.slane %v158, %v164
    %v167 = vunpack.c.l.s4 1966171168
    %v168 = vunpack.c.0.s8 %v167
    %v169 = vlaneseq
    %v170 = vshrl.u32 %v169, 7
    %v171 = vsub.s32 %v168, %v170
    %v172 = vrot.slane %v165, %v171
    %v174 = vadd.f32 %v155, %v172
    %v175 = vlaneseq
    %vm176 = vcmp.ge.s32.totalorder %v175, 0
    %vm177 = vcmp.lt.s32.totalorder %v175, 256
    %vm178 = vmand %vm176, %vm177
    %179 = vst.msk [vmem:[#allocation2] sm:$0x3] %vm178, %v174
    %s180 = scalar_lea.vmem [#allocation3], 8
    %v181 = vld [vmem:[%s180] sm:$0xff]
    %s182 = scalar_lea.vmem %s0, 2
    %v183 = vld [vmem:[%s182] sm:$0x3]
    %v185 = vcombine.high %v181, %v181
    %v187 = vsel %vm44, %v181, -inf
    %v188 = vrot.slane %v187, 4
    %v189 = vmax.f32 %v187, %v188
    %v190 = vrot.slane %v189, 2
    %v191 = vmax.f32 %v189, %v190
    %v192 = vrot.slane %v191, 1
    %v193 = vmax.f32 %v191, %v192
    %v194 = vsel %vm44, %v185, -inf
    %v195 = vrot.slane %v194, 4
    %v196 = vmax.f32 %v194, %v195
    %v197 = vrot.slane %v196, 2
    %v198 = vmax.f32 %v196, %v197
    %v199 = vrot.slane %v198, 1
    %v200 = vmax.f32 %v198, %v199
    %v203 = vcombine.low %v193, %v200
    %v205 = vsub.f32 %v181, %v203
    %v206 = vmul.f32 %v205, 1.442695
    %v207 = vpow.pop %v206
    %v209 = vcombine.high %v207, %v207
    %v211 = vsel %vm44, %v207, 0.0
    %v212 = vrot.slane %v211, 4
    %v213 = vadd.f32 %v211, %v212
    %v214 = vrot.slane %v213, 2
    %v215 = vadd.f32 %v213, %v214
    %v216 = vrot.slane %v215, 1
    %v217 = vadd.f32 %v215, %v216
    %v218 = vsel %vm44, %v209, 0.0
    %v219 = vrot.slane %v218, 4
    %v220 = vadd.f32 %v218, %v219
    %v221 = vrot.slane %v220, 2
    %v222 = vadd.f32 %v220, %v221
    %v223 = vrot.slane %v222, 1
    %v224 = vadd.f32 %v222, %v223
    %v225 = vlog2.pop %v217
    %v226 = vmul.f32 %v225, 0.6931472
    %v227 = vlog2.pop %v224
    %v228 = vmul.f32 %v227, 0.6931472
    %v229 = vlaneseq
    %v230 = vshrl.u32 %v229, 7
    %v231 = vsub.s32 0, %v230
    %v232 = vrot.slane %v183, %v231
    %v233 = vlaneseq
    %v234 = vshrl.u32 %v233, 7
    %v235 = vsub.s32 1, %v234
    %v236 = vrot.slane %v183, %v235
    %vm237 = vcmp.eq.s32.totalorder %v88, %v232
    %vm238 = vcmp.eq.s32.totalorder %v88, %v236
    %v240 = vcombine.high %v205, %v205
    %v242 = vsel %vm237, %v205, 0.0
    %v243 = vsel %vm238, %v240, 0.0
    %v244 = vsel %vm44, %v242, 0.0
    %v245 = vrot.slane %v244, 4
    %v246 = vadd.f32 %v244, %v245
    %v247 = vrot.slane %v246, 2
    %v248 = vadd.f32 %v246, %v247
    %v249 = vrot.slane %v248, 1
    %v250 = vadd.f32 %v248, %v249
    %v251 = vsel %vm44, %v243, 0.0
    %v252 = vrot.slane %v251, 4
    %v253 = vadd.f32 %v251, %v252
    %v254 = vrot.slane %v253, 2
    %v255 = vadd.f32 %v253, %v254
    %v256 = vrot.slane %v255, 1
    %v257 = vadd.f32 %v255, %v256
    %v258 = vsub.f32 %v250, %v226
    %v259 = vsub.f32 %v257, %v228
    %v260 = vmul.f32 %v258, 1.442695
    %v261 = vpow.pop %v260
    %v262 = vmul.f32 %v259, 1.442695
    %v263 = vpow.pop %v262
    %v264 = vsel %vm237, %v127, 0.0
    %v265 = vsel %vm238, %v127, 0.0
    %v266 = vsel %vm44, %v264, 0.0
    %v267 = vrot.slane %v266, 4
    %v268 = vadd.f32 %v266, %v267
    %v269 = vrot.slane %v268, 2
    %v270 = vadd.f32 %v268, %v269
    %v271 = vrot.slane %v270, 1
    %v272 = vadd.f32 %v270, %v271
    %v273 = vsel %vm44, %v265, 0.0
    %v274 = vrot.slane %v273, 4
    %v275 = vadd.f32 %v273, %v274
    %v276 = vrot.slane %v275, 2
    %v277 = vadd.f32 %v275, %v276
    %v278 = vrot.slane %v277, 1
    %v279 = vadd.f32 %v277, %v278
    %v280 = vmul.f32 %v258, %v272
    %v281 = vmul.f32 %v259, %v279
    %v282 = vsub.f32 1.0, %v261
    %v283 = vsub.f32 1.0, %v263
    %v284 = vmul.f32 %v282, %v282
    %v285 = vmul.f32 %v283, %v283
    %v286 = vsub.f32 0.0, %v284
    %v287 = vsub.f32 0.0, %v285
    %v288 = vmul.f32 %v286, %v280
    %v289 = vmul.f32 %v287, %v281
    %s290 = scalar_lea.vmem [#allocation2], 2
    %v291 = vld [vmem:[%s290] sm:$0x3]
    %v294 = vcombine.low %v288, %v289
    %v296 = vunpack.c.l.s4 1966171168
    %v297 = vunpack.c.0.s8 %v296
    %v298 = vlaneseq
    %v299 = vshrl.u32 %v298, 7
    %v300 = vsub.s32 %v297, %v299
    %v301 = vrot.slane %v294, %v300
    %v303 = vunpack.c.l.s4 1966171168
    %v304 = vunpack.c.0.s8 %v303
    %v305 = vlaneseq
    %v306 = vshrl.u32 %v305, 7
    %v307 = vsub.s32 %v304, %v306
    %v308 = vrot.slane %v301, %v307
    %v310 = vadd.f32 %v291, %v308
    %311 = vst.msk [vmem:[%s290] sm:$0x3] %vm178, %v310
    // Predicated region
    $region22: #{tpu_custom_call.1} parent=1 // pred_check
      %p312 = pneg %p28
    $region23: #{tpu_custom_call.1} parent=1 // pred_check_branch
      %314 = sbr.rel (%p312) target = $region25
    $region24: #{tpu_custom_call.1} parent=1 // pred_region
      %v315 = vld [vmem:[#allocation2] sm:$0x3]
      %v317 = vlaneseq
      %v318 = vshrl.u32 %v317, 7
      %v319 = vsub.s32 0, %v318
      %v320 = vrot.slane %v315, %v319
      %v321 = vlaneseq
      %v322 = vshrl.u32 %v321, 7
      %v323 = vsub.s32 1, %v322
      %v324 = vrot.slane %v315, %v323
      %vm327 = vcmask 1040384
      %v328 = vsel %vm327, %v320, 0.0
      %v329 = vsel %vm327, %v324, 0.0
      %v330 = vadd.f32 %v328, %v329
      %331 = vadd.xlane.f32.xlu0 %v330
      %v332 = vpop.xlane.xlu0 %331
      %vm333 = vcmask 0
      %334 = vst.msk [vmem:[%s3] sm:$0x1] %vm333, %v332
      %v335 = vld [vmem:[%s290] sm:$0x3]
      %v337 = vlaneseq
      %v338 = vshrl.u32 %v337, 7
      %v339 = vsub.s32 0, %v338
      %v340 = vrot.slane %v335, %v339
      %v341 = vlaneseq
      %v342 = vshrl.u32 %v341, 7
      %v343 = vsub.s32 1, %v342
      %v344 = vrot.slane %v335, %v343
      %v347 = vsel %vm327, %v340, 0.0
      %v348 = vsel %vm327, %v344, 0.0
      %v349 = vadd.f32 %v347, %v348
      %350 = vadd.xlane.f32.xlu0 %v349
      %v351 = vpop.xlane.xlu0 %350
      %s352 = scalar_lea.vmem %s3, 1
      %353 = vst.msk [vmem:[%s352] sm:$0x1] %vm333, %v351
    $region25: #{tpu_custom_call.1} parent=1 // pred_fallthru
      _
    // Predicated region
    $region26: #{tpu_custom_call.1} parent=1 // pred_check
      _
    $region27: #{tpu_custom_call.1} parent=1 // pred_check_branch
      %355 = sbr.rel (0) target = $region29
    $region28: #{tpu_custom_call.1} parent=1 // pred_region
      _
    $region29: #{tpu_custom_call.1} parent=1 // pred_fallthru
      _
    // Predicated region
    $region30: #{tpu_custom_call.1} parent=1 // pred_check
      _
    $region31: #{tpu_custom_call.1} parent=1 // pred_check_branch
      %357 = sbr.rel (0) target = $region33
    $region32: #{tpu_custom_call.1} parent=1 // pred_region
      _
    $region33: #{tpu_custom_call.1} parent=1 // pred_fallthru
      _
    %358 = vsyncpa [#allocation4], 1

</llo_original>
